<compile_context>
chip_gen: v7x
topology: tpu7x:2x2x1
jax: 0.10.0
libtpu: 0.0.40
codegen_flags: <defaults>
</compile_context>

<pallas_src>
import functools

import jax
import jax.numpy as jnp
from jax.experimental import pallas as pl
from jax.experimental.pallas import tpu as pltpu

DISC_WIDTH = 10          # hidden width of the discriminator MLP
NUM_DIM_X = 1            # input feature dim (module-level constant in the spec)

HID = 16                 # padded hidden dim (sublane axis); rows 10..15 stay zero
LANE = 128               # lane width
W1T_LANE = 32            # lane offset of w1^T inside the param blob
MAX_TB = 2048            # max batch elements (lanes) per grid step
SMALL_B = 256            # below this, a single full-extent block (grid = 1)


def _round_up(x, m):
    return ((x + m - 1) // m) * m


def _pick_tiling(b):
    """Choose (lane tile, grid size) for a batch of b columns."""
    if b <= SMALL_B:
        return b, 1                       # one full-extent block, no padding
    # >= 2 grid steps so v7x megacore can shard the "parallel" batch axis.
    n_tiles = max(2, pl.cdiv(b, MAX_TB))
    tb = _round_up(pl.cdiv(b, n_tiles), LANE)
    return tb, pl.cdiv(b, tb)


def _disc_mlp_kernel(*refs, din, n_io):
    """Fused 3-layer MLP, transposed layout: features on sublanes, batch on lanes.

    refs = (x_ref[, g_ref], p_ref, out_x_ref[, out_g_ref])

    Param blob layout, an (16, W) f32 array (W >= 128):
      lanes 0..15            : w2^T  (16, 16)   rows/cols >= 10 are zero
      lane 16                : b1 column (16, 1)
      lane 17                : b2 column
      lane 18                : w3 column
      lane 19, sublane 0     : b3
      lanes 32..32+din-1     : w1^T (16, din)   rows >= 10 are zero
    """
    in_refs = refs[:n_io]
    p_ref = refs[n_io]
    out_refs = refs[n_io + 1:]

    w2t = p_ref[:, 0:HID]                      # (16, 16)
    b1 = p_ref[:, 16:17]                       # (16, 1)
    b2 = p_ref[:, 17:18]                       # (16, 1)
    w3 = p_ref[:, 18:19]                       # (16, 1)
    b3 = p_ref[0:1, 19:20]                     # (1, 1)
    if din == 1:
        w1c = p_ref[:, W1T_LANE:W1T_LANE + 1]  # (16, 1)
    else:
        w1t = p_ref[:, W1T_LANE:W1T_LANE + din]  # (16, din), din <= W - 32

    def mlp(xin):                               # (din, TB) -> (1, TB)
        if din == 1:
            # Layer 1 with K == 1: pure VPU broadcast multiply, no MXU.
            h1 = jax.nn.sigmoid(w1c * xin + b1)               # (16, TB)
        else:
            h1 = jax.nn.sigmoid(
                jnp.dot(w1t, xin, preferred_element_type=jnp.float32) + b1)
        # Layer 2: (16,16) @ (16,TB); zero pad rows/cols neutralize sigmoid(0).
        h2 = jax.nn.sigmoid(
            jnp.dot(w2t, h1, preferred_element_type=jnp.float32) + b2)
        # Layer 3 (N == 1): sublane reduce; w3 rows >= 10 are zero.
        return jnp.sum(h2 * w3, axis=0, keepdims=True) + b3   # (1, TB)

    for x_ref, o_ref in zip(in_refs, out_refs):
        o_ref[...] = mlp(x_ref[...])


def _disc_net_pallas(xs, param_blob, din):
    """Run the fused MLP on one or more (din, B) transposed batches."""
    b = xs[0].shape[1]
    tb, grid = _pick_tiling(b)
    kernel = functools.partial(_disc_mlp_kernel, din=din, n_io=len(xs))

    in_specs = [pl.BlockSpec((din, tb), lambda i: (0, i)) for _ in xs]
    # packed params: same block every step -> stays VMEM-resident
    in_specs.append(pl.BlockSpec(param_blob.shape, lambda i: (0, 0)))

    outs = pl.pallas_call(
        kernel,
        out_shape=tuple(jax.ShapeDtypeStruct((1, b), jnp.float32) for _ in xs),
        grid=(grid,),
        in_specs=in_specs,
        out_specs=tuple(pl.BlockSpec((1, tb), lambda i: (0, i)) for _ in xs),
        compiler_params=pltpu.CompilerParams(
            dimension_semantics=("parallel",)),   # batch tiles are independent
    )(*xs, param_blob)
    if not isinstance(outs, (tuple, list)):
        outs = (outs,)
    return tuple(outs)


@functools.partial(jax.jit, static_argnames=("din",))
def _disc_forward(x, g, param_blob, din):
    """Single fused evaluation of disc_net on x and G (one pallas_call)."""
    bx, bg = x.shape[0], g.shape[0]
    # (B, 1) -> (1, B) is a free reshape; din > 1 needs a real transpose.
    to_t = (lambda a: a.reshape(1, -1)) if din == 1 else (lambda a: a.T)
    x_t, g_t = to_t(x), to_t(g)
    if bx == bg:
        ox, og = _disc_net_pallas((x_t, g_t), param_blob, din)
    else:
        (ox,) = _disc_net_pallas((x_t,), param_blob, din)
        (og,) = _disc_net_pallas((g_t,), param_blob, din)
    return ox.reshape(bx, 1), og.reshape(bg, 1)


class DiscPallas:
    """JAX/Pallas port of the PyTorch Disc module."""

    def __init__(self, num_dim_x, key):
        k1, k2, k3, k4, k5, k6 = jax.random.split(key, 6)

        def linear_init(kw, kb, fan_in, fan_out):
            # PyTorch nn.Linear default: U(-1/sqrt(fan_in), 1/sqrt(fan_in))
            bound = 1.0 / jnp.sqrt(jnp.float32(fan_in))
            w = jax.random.uniform(kw, (fan_in, fan_out), jnp.float32,
                                   -bound, bound)       # stored as (in, out)
            b = jax.random.uniform(kb, (fan_out,), jnp.float32, -bound, bound)
            return w, b

        w1, b1 = linear_init(k1, k2, num_dim_x, DISC_WIDTH)
        w2, b2 = linear_init(k3, k4, DISC_WIDTH, DISC_WIDTH)
        w3, b3 = linear_init(k5, k6, DISC_WIDTH, 1)

        self.num_dim_x = num_dim_x
        self.params = (w1, b1, w2, b2, w3, b3)          # unpadded, for the ref
        self.param_blob = self._build_param_blob(
            w1, b1, w2, b2, w3, b3, num_dim_x)

    @staticmethod
    def _build_param_blob(w1, b1, w2, b2, w3, b3, din):
        # All padding MUST stay zero (see correctness invariant at top).
        width = _round_up(W1T_LANE + din, LANE)
        blob = jnp.zeros((HID, width), jnp.float32)
        blob = blob.at[:DISC_WIDTH, :DISC_WIDTH].set(w2.T)          # w2^T
        blob = blob.at[:DISC_WIDTH, 16].set(b1)
        blob = blob.at[:DISC_WIDTH, 17].set(b2)
        blob = blob.at[:DISC_WIDTH, 18].set(w3[:, 0])
        blob = blob.at[0, 19].set(b3[0])
        blob = blob.at[:DISC_WIDTH, W1T_LANE:W1T_LANE + din].set(w1.T)
        return blob

    def _disc_net_ref(self, x):
        w1, b1, w2, b2, w3, b3 = self.params
        h1 = jax.nn.sigmoid(x @ w1 + b1)
        h2 = jax.nn.sigmoid(h1 @ w2 + b2)
        return h2 @ w3 + b3

    def __call__(self, x, g):
        return _disc_forward(x, g, self.param_blob, din=self.num_dim_x)


if __name__ == "__main__":
    key = jax.random.PRNGKey(0)
    k_params, k_x, k_g = jax.random.split(key, 3)

    disc = DiscPallas(NUM_DIM_X, k_params)

    # Small batch (single full-extent block, grid = 1)
    batch = 8
    x = jax.random.normal(k_x, (batch, NUM_DIM_X), dtype=jnp.float32)
    g = jax.random.normal(k_g, (batch, NUM_DIM_X), dtype=jnp.float32)
    dx, dg = disc(x, g)
    jax.block_until_ready((dx, dg))

    dx_ref = disc._disc_net_ref(x)
    dg_ref = disc._disc_net_ref(g)
    assert dx.shape == (batch, 1) and dg.shape == (batch, 1)
    assert jnp.allclose(dx, dx_ref, atol=1e-5, rtol=1e-5)
    assert jnp.allclose(dg, dg_ref, atol=1e-5, rtol=1e-5)

    # Larger batch: exercises the tiled path (grid = 2, partial trailing block).
    batch2 = 384
    x2 = jax.random.normal(k_x, (batch2, NUM_DIM_X), dtype=jnp.float32)
    g2 = jax.random.normal(k_g, (batch2, NUM_DIM_X), dtype=jnp.float32)
    dx2, dg2 = disc(x2, g2)
    jax.block_until_ready((dx2, dg2))
    assert jnp.allclose(dx2, disc._disc_net_ref(x2), atol=1e-5, rtol=1e-5)
    assert jnp.allclose(dg2, disc._disc_net_ref(g2), atol=1e-5, rtol=1e-5)

    print("KERNEL_OK")
</pallas_src>

<mosaic_0001>
module attributes {stable_mosaic.version = 11 : i64} {
  func.func @_disc_mlp_kernel(%arg0: i32, %arg1: memref<1x8xf32, #tpu.memory_space<vmem>>, %arg2: memref<1x8xf32, #tpu.memory_space<vmem>>, %arg3: memref<16x128xf32, #tpu.memory_space<vmem>>, %arg4: memref<1x8xf32, #tpu.memory_space<vmem>>, %arg5: memref<1x8xf32, #tpu.memory_space<vmem>>) attributes {dimension_semantics = [#tpu.dimension_semantics<parallel>], iteration_bounds = array<i64: 1>, scalar_prefetch = 0 : i64, scratch_operands = 0 : i64, tpu.core_type = #tpu.core_type<tc>, window_params = [{transform_indices = @transform_0, window_bounds = array<i64: 1, 8>}, {transform_indices = @transform_1, window_bounds = array<i64: 1, 8>}, {pipeline_mode = #tpu.pipeline_mode<synchronous>, transform_indices = @transform_2, window_bounds = array<i64: 16, 128>}, {transform_indices = @transform_3, window_bounds = array<i64: 1, 8>}, {transform_indices = @transform_4, window_bounds = array<i64: 1, 8>}]} {
    %c0 = arith.constant 0 : index
    %c0_0 = arith.constant 0 : index
    %0 = vector.load %arg3[%c0, %c0_0] : memref<16x128xf32, #tpu.memory_space<vmem>>, vector<16x16xf32>
    %c0_1 = arith.constant 0 : index
    %c16 = arith.constant 16 : index
    %1 = vector.load %arg3[%c0_1, %c16] : memref<16x128xf32, #tpu.memory_space<vmem>>, vector<16x1xf32>
    %c0_2 = arith.constant 0 : index
    %c17 = arith.constant 17 : index
    %2 = vector.load %arg3[%c0_2, %c17] : memref<16x128xf32, #tpu.memory_space<vmem>>, vector<16x1xf32>
    %c0_3 = arith.constant 0 : index
    %c18 = arith.constant 18 : index
    %3 = vector.load %arg3[%c0_3, %c18] : memref<16x128xf32, #tpu.memory_space<vmem>>, vector<16x1xf32>
    %c0_4 = arith.constant 0 : index
    %c19 = arith.constant 19 : index
    %4 = vector.load %arg3[%c0_4, %c19] : memref<16x128xf32, #tpu.memory_space<vmem>>, vector<1x1xf32>
    %c0_5 = arith.constant 0 : index
    %c32 = arith.constant 32 : index
    %5 = vector.load %arg3[%c0_5, %c32] : memref<16x128xf32, #tpu.memory_space<vmem>>, vector<16x1xf32>
    %c0_6 = arith.constant 0 : index
    %c0_7 = arith.constant 0 : index
    %6 = vector.load %arg1[%c0_6, %c0_7] : memref<1x8xf32, #tpu.memory_space<vmem>>, vector<1x8xf32>
    %7 = vector.broadcast %5 : vector<16x1xf32> to vector<16x8xf32>
    %8 = vector.broadcast %6 : vector<1x8xf32> to vector<16x8xf32>
    %9 = arith.mulf %7, %8 : vector<16x8xf32>
    %10 = vector.broadcast %1 : vector<16x1xf32> to vector<16x8xf32>
    %11 = arith.addf %9, %10 : vector<16x8xf32>
    %12 = arith.negf %11 : vector<16x8xf32>
    %13 = math.exp %12 : vector<16x8xf32>
    %cst = arith.constant 1.000000e+00 : f32
    %14 = vector.broadcast %cst : f32 to vector<16x8xf32>
    %15 = arith.addf %14, %13 : vector<16x8xf32>
    %16 = arith.divf %14, %15 : vector<16x8xf32>
    %cst_8 = arith.constant dense<0.000000e+00> : vector<16x8xf32>
    %17 = tpu.matmul %0, %16, %cst_8 {dimension_numbers = #tpu.dot_dimension_numbers<[1], [0], [0], [1], [0, 0, 1, 1], [], []>} : vector<16x16xf32>, vector<16x8xf32>, vector<16x8xf32> -> vector<16x8xf32>
    %18 = vector.broadcast %2 : vector<16x1xf32> to vector<16x8xf32>
    %19 = arith.addf %17, %18 : vector<16x8xf32>
    %20 = arith.negf %19 : vector<16x8xf32>
    %21 = math.exp %20 : vector<16x8xf32>
    %cst_9 = arith.constant 1.000000e+00 : f32
    %22 = vector.broadcast %cst_9 : f32 to vector<16x8xf32>
    %23 = arith.addf %22, %21 : vector<16x8xf32>
    %24 = arith.divf %22, %23 : vector<16x8xf32>
    %25 = vector.broadcast %3 : vector<16x1xf32> to vector<16x8xf32>
    %26 = arith.mulf %24, %25 : vector<16x8xf32>
    %cst_10 = arith.constant dense<0.000000e+00> : vector<8xf32>
    %27 = vector.multi_reduction <add>, %26, %cst_10 [0] : vector<16x8xf32> to vector<8xf32>
    %28 = vector.shape_cast %27 : vector<8xf32> to vector<1x8xf32>
    %29 = vector.broadcast %4 : vector<1x1xf32> to vector<1x8xf32>
    %30 = arith.addf %28, %29 : vector<1x8xf32>
    %c0_11 = arith.constant 0 : index
    %c0_12 = arith.constant 0 : index
    %31 = vector.load %arg4[%c0_11, %c0_12] : memref<1x8xf32, #tpu.memory_space<vmem>>, vector<1x8xf32>
    tpu.vector_store %arg4[%c0_11, %c0_12], %30 {strides = array<i32>} : memref<1x8xf32, #tpu.memory_space<vmem>>, vector<1x8xf32>,
    %c0_13 = arith.constant 0 : index
    %c0_14 = arith.constant 0 : index
    %32 = vector.load %arg2[%c0_13, %c0_14] : memref<1x8xf32, #tpu.memory_space<vmem>>, vector<1x8xf32>
    %33 = vector.broadcast %5 : vector<16x1xf32> to vector<16x8xf32>
    %34 = vector.broadcast %32 : vector<1x8xf32> to vector<16x8xf32>
    %35 = arith.mulf %33, %34 : vector<16x8xf32>
    %36 = vector.broadcast %1 : vector<16x1xf32> to vector<16x8xf32>
    %37 = arith.addf %35, %36 : vector<16x8xf32>
    %38 = arith.negf %37 : vector<16x8xf32>
    %39 = math.exp %38 : vector<16x8xf32>
    %cst_15 = arith.constant 1.000000e+00 : f32
    %40 = vector.broadcast %cst_15 : f32 to vector<16x8xf32>
    %41 = arith.addf %40, %39 : vector<16x8xf32>
    %42 = arith.divf %40, %41 : vector<16x8xf32>
    %cst_16 = arith.constant dense<0.000000e+00> : vector<16x8xf32>
    %43 = tpu.matmul %0, %42, %cst_16 {dimension_numbers = #tpu.dot_dimension_numbers<[1], [0], [0], [1], [0, 0, 1, 1], [], []>} : vector<16x16xf32>, vector<16x8xf32>, vector<16x8xf32> -> vector<16x8xf32>
    %44 = vector.broadcast %2 : vector<16x1xf32> to vector<16x8xf32>
    %45 = arith.addf %43, %44 : vector<16x8xf32>
    %46 = arith.negf %45 : vector<16x8xf32>
    %47 = math.exp %46 : vector<16x8xf32>
    %cst_17 = arith.constant 1.000000e+00 : f32
    %48 = vector.broadcast %cst_17 : f32 to vector<16x8xf32>
    %49 = arith.addf %48, %47 : vector<16x8xf32>
    %50 = arith.divf %48, %49 : vector<16x8xf32>
    %51 = vector.broadcast %3 : vector<16x1xf32> to vector<16x8xf32>
    %52 = arith.mulf %50, %51 : vector<16x8xf32>
    %cst_18 = arith.constant dense<0.000000e+00> : vector<8xf32>
    %53 = vector.multi_reduction <add>, %52, %cst_18 [0] : vector<16x8xf32> to vector<8xf32>
    %54 = vector.shape_cast %53 : vector<8xf32> to vector<1x8xf32>
    %55 = vector.broadcast %4 : vector<1x1xf32> to vector<1x8xf32>
    %56 = arith.addf %54, %55 : vector<1x8xf32>
    %c0_19 = arith.constant 0 : index
    %c0_20 = arith.constant 0 : index
    %57 = vector.load %arg5[%c0_19, %c0_20] : memref<1x8xf32, #tpu.memory_space<vmem>>, vector<1x8xf32>
    tpu.vector_store %arg5[%c0_19, %c0_20], %56 {strides = array<i32>} : memref<1x8xf32, #tpu.memory_space<vmem>>, vector<1x8xf32>,
    return
  }
  func.func @transform_0(%arg0: i32) -> (i32, i32) {
    %c0_i32 = arith.constant 0 : i32
    %c0_i32_0 = arith.constant 0 : i32
    return %c0_i32, %arg0 : i32, i32
  }
  func.func @transform_1(%arg0: i32) -> (i32, i32) {
    %c0_i32 = arith.constant 0 : i32
    %c0_i32_0 = arith.constant 0 : i32
    return %c0_i32, %arg0 : i32, i32
  }
  func.func @transform_2(%arg0: i32) -> (i32, i32) {
    %c0_i32 = arith.constant 0 : i32
    %c0_i32_0 = arith.constant 0 : i32
    %c0_i32_1 = arith.constant 0 : i32
    return %c0_i32, %c0_i32_0 : i32, i32
  }
  func.func @transform_3(%arg0: i32) -> (i32, i32) {
    %c0_i32 = arith.constant 0 : i32
    %c0_i32_0 = arith.constant 0 : i32
    return %c0_i32, %arg0 : i32, i32
  }
  func.func @transform_4(%arg0: i32) -> (i32, i32) {
    %c0_i32 = arith.constant 0 : i32
    %c0_i32_0 = arith.constant 0 : i32
    return %c0_i32, %arg0 : i32, i32
  }
}

</mosaic_0001>

<llo_original>
// kernel: _disc_forward.1
$region0: #{_disc_forward.1}
  #allocation0 [shape = 'u32[]', space=smem, size = 0x4, offset = 0x4, fixed_abs, tag = 'smem constant byte address 0x4 - core index']
  #allocation1 [shape = 'u32[144,128]{1,0:T(1,128)}', space=vmem, size = 0x12000, scoped, tag = 'internal scratch']
  %s0 = inlined_call_operand.vmem [shape: f32[1,8], index: 0, kind: input, shape index: {}]
  %s1 = inlined_call_operand.vmem [shape: f32[1,8], index: 1, kind: input, shape index: {}]
  %s2 = inlined_call_operand.hbm [shape: f32[16,128], index: 2, kind: input, shape index: {}]
  %s3 = inlined_call_operand.hbm [shape: f32[1,8], index: 3, kind: output, shape index: {0}]
  %s4 = inlined_call_operand.hbm [shape: f32[1,8], index: 4, kind: output, shape index: {1}]
  %5 = xla_tuple %s3, %s4
  %s6 = sld [smem:[#allocation0]]
  $region34: #{_disc_forward.1} parent=0
    _
  %s8 = ssub.s32 1, %s6
  %s9 = scalar_select 0, %s8, %s6
  $region1: #{_disc_forward.1} parent=0
    #allocation2 [shape = 'u8[8192]{0}', space=vmem, size = 0x2000, scoped, tag = 'input window, operand 2, single buffered']
    #allocation3 [shape = 's32[1]{0}', space=sflag, size = 0x4, scoped, tag = 'scoped memory for _disc_forward.1']
    #allocation4 [shape = 's32[1]{0}', space=sflag, size = 0x4, scoped, tag = 'scoped memory for _disc_forward.1']
    #allocation5 [shape = 'u8[512]{0}', space=vmem, size = 0x400, scoped, tag = 'output window, operand 0, single buffered']
    #allocation6 [shape = 'u8[512]{0}', space=vmem, size = 0x400, scoped, tag = 'output window, operand 1, single buffered']
    #allocation7 [shape = 's32[1]{0}', space=sflag, size = 0x4, scoped, tag = 'scoped memory for _disc_forward.1']
    %10 = vsyncpa [#allocation3], 0
    %11 = vsyncpa [#allocation4], 0
    %12 = vsyncpa [#allocation7], 0
    // Predicated region
    $region2: #{_disc_forward.1} parent=1 // pred_check
      _
    $region3: #{_disc_forward.1} parent=1 // pred_check_branch
      %14 = sbr.rel (0) target = $region5
    $region4: #{_disc_forward.1} parent=1 // pred_region
      _
    $region5: #{_disc_forward.1} parent=1 // pred_fallthru
      _
    // Predicated region
    $region6: #{_disc_forward.1} parent=1 // pred_check
      _
    $region7: #{_disc_forward.1} parent=1 // pred_check_branch
      %16 = sbr.rel (0) target = $region9
    $region8: #{_disc_forward.1} parent=1 // pred_region
      _
    $region9: #{_disc_forward.1} parent=1 // pred_fallthru
      _
    // Predicated region
    $region10: #{_disc_forward.1} parent=1 // pred_check
      _
    $region11: #{_disc_forward.1} parent=1 // pred_check_branch
      %18 = sbr.rel (0) target = $region13
    $region12: #{_disc_forward.1} parent=1 // pred_region
      %s20 = ssub.s32 256, 256
      %21 = vsyncadd [#allocation3], %s20
      %s22 = sshll.u32 [#allocation2], 4
      %s23 = int_to_ptr.vmem [resolvable:$true] %s22
      %28 = dma.hbm_to_vmem [thread:$0]  %s2, 256, %s23, [#allocation3], 128, 128, 8
    $region13: #{_disc_forward.1} parent=1 // pred_fallthru
      _
    // Predicated region
    $region14: #{_disc_forward.1} parent=1 // pred_check
      _
    $region15: #{_disc_forward.1} parent=1 // pred_check_branch
      %30 = sbr.rel (0) target = $region17
    $region16: #{_disc_forward.1} parent=1 // pred_region
      %31 = dma.done [#allocation3], 256
    $region17: #{_disc_forward.1} parent=1 // pred_fallthru
      _
    %v32 = vld [vmem:[#allocation2] sm:$0xff]
    %v33 = vld [vmem:[#allocation2 + $0x8] sm:$0xff]
    %v34 = vld [vmem:[#allocation2] sm:$0x1]
    %v35 = vld [vmem:[%s0] sm:$0x1]
    %37 = vset.pattern.permute.xlu0 32
    %38 = vperm.xlu0 %37, %v32
    %v39 = vpop.permute.xlu0 %38
    %42 = vset.pattern.permute.xlu0 32
    %43 = vperm.xlu0 %42, %v33
    %v44 = vpop.permute.xlu0 %43
    %v47 = vlaneseq
    %v48 = vshrl.u32 %v47, 7
    %v49 = vsub.s32 0, %v48
    %v50 = vrot.slane %v35, %v49
    %v52 = vmul.f32 %v39, %v50
    %v53 = vmul.f32 %v44, %v50
    %54 = vset.pattern.permute.xlu0 16
    %55 = vperm.xlu0 %54, %v32
    %v56 = vpop.permute.xlu0 %55
    %58 = vset.pattern.permute.xlu0 16
    %59 = vperm.xlu0 %58, %v33
    %v60 = vpop.permute.xlu0 %59
    %v62 = vadd.f32 %v52, %v56
    %v63 = vadd.f32 %v53, %v60
    %v64 = vxor.u32 %v62, 2147483648
    %v65 = vxor.u32 %v63, 2147483648
    %v66 = vmul.f32 %v64, 1.442695
    %v67 = vpow.pop %v66
    %v68 = vmul.f32 %v65, 1.442695
    %v69 = vpow.pop %v68
    %v70 = vadd.f32 %v67, 1.0
    %v71 = vadd.f32 %v69, 1.0
    %v72 = vrcp.pop %v70
    %v73 = vmul.f32 1.0, %v72
    %v74 = vrcp.pop %v71
    %v75 = vmul.f32 1.0, %v74
    %76 = vset.pattern.permute.xlu0 17
    %77 = vperm.xlu0 %76, %v32
    %v78 = vpop.permute.xlu0 %77
    %80 = vset.pattern.permute.xlu0 17
    %81 = vperm.xlu0 %80, %v33
    %v82 = vpop.permute.xlu0 %81
    %vm84 = vcmask 130048
    %v85 = vsel %vm84, %v32, 0
    %v87 = vsel %vm84, %v33, 0
    %89 = vmatprep.subr.mxu0 0.0
    %90 = vmatpush1.msra.mxu0 %v73
    %91 = vmatprep.subr.mxu0 0.0
    %92 = vmatpush1.msra.mxu0 %v75
    %93 = vmatprep.subr.mxu0 0.0
    %94 = vmatpush1.msra.mxu0 0.0
    %95 = vmatprep.subr.mxu0 0.0
    %96 = vmatpush1.msra.mxu0 0.0
    %97 = vmatprep.subr.mxu0 0.0
    %98 = vmatpush1.msra.mxu0 0.0
    %99 = vmatprep.subr.mxu0 0.0
    %100 = vmatpush1.msra.mxu0 0.0
    %101 = vmatprep.subr.mxu0 0.0
    %102 = vmatpush1.msra.mxu0 0.0
    %103 = vmatprep.subr.mxu0 0.0
    %104 = vmatpush1.msra.mxu0 0.0
    %105 = vmatprep.subr.mxu0 0.0
    %106 = vmatpush1.msra.mxu0 0.0
    %107 = vmatprep.subr.mxu0 0.0
    %108 = vmatpush1.msra.mxu0 0.0
    %109 = vmatprep.subr.mxu0 0.0
    %110 = vmatpush1.msra.mxu0 0.0
    %111 = vmatprep.subr.mxu0 0.0
    %112 = vmatpush1.msra.mxu0 0.0
    %113 = vmatprep.subr.mxu0 0.0
    %114 = vmatpush1.msra.mxu0 0.0
    %115 = vmatprep.subr.mxu0 0.0
    %116 = vmatpush1.msra.mxu0 0.0
    %117 = vmatprep.subr.mxu0 0.0
    %118 = vmatpush1.msra.mxu0 0.0
    %119 = vmatprep.subr.mxu0 0.0
    %120 = vmatpush1.msra.mxu0 0.0
    %121 = vmatprep.subr.mxu0 0.0
    %122 = vmatpush1.msra.mxu0 0.0
    %123 = vmatprep.subr.mxu0 0.0
    %124 = vmatpush1.msra.mxu0 0.0
    %125 = vmatprep.subr.mxu0 0.0
    %126 = vmatpush1.msra.mxu0 0.0
    %127 = vmatprep.subr.mxu0 0.0
    %128 = vmatpush1.msra.mxu0 0.0
    %129 = vmatprep.subr.mxu0 0.0
    %130 = vmatpush1.msra.mxu0 0.0
    %131 = vmatprep.subr.mxu0 0.0
    %132 = vmatpush1.msra.mxu0 0.0
    %133 = vmatprep.subr.mxu0 0.0
    %134 = vmatpush1.msra.mxu0 0.0
    %135 = vmatprep.subr.mxu0 0.0
    %136 = vmatpush1.msra.mxu0 0.0
    %137 = vmatprep.subr.mxu0 0.0
    %138 = vmatpush1.msra.mxu0 0.0
    %139 = vmatprep.subr.mxu0 0.0
    %140 = vmatpush1.msra.mxu0 0.0
    %141 = vmatprep.subr.mxu0 0.0
    %142 = vmatpush1.msra.mxu0 0.0
    %143 = vmatprep.subr.mxu0 0.0
    %144 = vmatpush1.msra.mxu0 0.0
    %145 = vmatprep.subr.mxu0 0.0
    %146 = vmatpush1.msra.mxu0 0.0
    %147 = vmatprep.subr.mxu0 0.0
    %148 = vmatpush1.msra.mxu0 0.0
    %149 = vmatprep.subr.mxu0 0.0
    %150 = vmatpush1.msra.mxu0 0.0
    %151 = vmatprep.subr.mxu0 0.0
    %152 = vmatpush1.msra.mxu0 0.0
    %153 = vmatprep.mubr.f32.mxu0 0.0
    %154 = vmatmul.mubr.f32.gmra.mrb[0].mxu0 %v85
    %v155 = vpop.f32.mrb[0].mxu0
    %v156 = vadd.f32 %v78, %v155
    %v157 = vpop.f32.mrb[0].mxu0
    %158 = vmatprep.mubr.f32.mxu0 0.0
    %159 = vmatmul.mubr.f32.gmra.mrb[0].mxu0 %v87
    %v160 = vpop.f32.mrb[0].mxu0
    %v161 = vadd.f32 %v82, %v160
    %v162 = vpop.f32.mrb[0].mxu0
    %163 = vdwg.mxu0
    %v164 = vxor.u32 %v156, 2147483648
    %v165 = vxor.u32 %v161, 2147483648
    %v166 = vmul.f32 %v164, 1.442695
    %v167 = vpow.pop %v166
    %v168 = vmul.f32 %v165, 1.442695
    %v169 = vpow.pop %v168
    %v170 = vadd.f32 %v167, 1.0
    %v171 = vadd.f32 %v169, 1.0
    %v172 = vrcp.pop %v170
    %v173 = vmul.f32 1.0, %v172
    %v174 = vrcp.pop %v171
    %v175 = vmul.f32 1.0, %v174
    %176 = vset.pattern.permute.xlu0 18
    %177 = vperm.xlu0 %176, %v32
    %v178 = vpop.permute.xlu0 %177
    %180 = vset.pattern.permute.xlu0 18
    %181 = vperm.xlu0 %180, %v33
    %v182 = vpop.permute.xlu0 %181
    %v184 = vmul.f32 %v173, %v178
    %v185 = vmul.f32 %v175, %v182
    %vm186 = vcmask 64512
    %v187 = vsel %vm186, %v184, 0.0
    %v188 = vsel %vm186, %v185, 0.0
    %v189 = vadd.f32 %v187, %v188
    %v190 = vrot.slane %v189, 4
    %v191 = vadd.f32 %v189, %v190
    %v192 = vrot.slane %v191, 2
    %v193 = vadd.f32 %v191, %v192
    %v194 = vrot.slane %v193, 1
    %v195 = vadd.f32 %v193, %v194
    %197 = vset.pattern.permute.xlu0 19
    %198 = vperm.xlu0 %197, %v34
    %v199 = vpop.permute.xlu0 %198
    %v201 = vadd.f32 %v195, %v199
    %vm202 = vcmask 57344
    %203 = vst.msk [vmem:[#allocation5] sm:$0x1] %vm202, %v201
    %v204 = vld [vmem:[%s1] sm:$0x1]
    %v206 = vlaneseq
    %v207 = vshrl.u32 %v206, 7
    %v208 = vsub.s32 0, %v207
    %v209 = vrot.slane %v204, %v208
    %v211 = vmul.f32 %v39, %v209
    %v212 = vmul.f32 %v44, %v209
    %v213 = vadd.f32 %v211, %v56
    %v214 = vadd.f32 %v212, %v60
    %v215 = vxor.u32 %v213, 2147483648
    %v216 = vxor.u32 %v214, 2147483648
    %v217 = vmul.f32 %v215, 1.442695
    %v218 = vpow.pop %v217
    %v219 = vmul.f32 %v216, 1.442695
    %v220 = vpow.pop %v219
    %v221 = vadd.f32 %v218, 1.0
    %v222 = vadd.f32 %v220, 1.0
    %v223 = vrcp.pop %v221
    %v224 = vmul.f32 1.0, %v223
    %v225 = vrcp.pop %v222
    %v226 = vmul.f32 1.0, %v225
    %227 = vmatprep.subr.mxu0 0.0
    %228 = vmatpush1.msra.mxu0 %v224
    %229 = vmatprep.subr.mxu0 0.0
    %230 = vmatpush1.msra.mxu0 %v226
    %231 = vmatprep.subr.mxu0 0.0
    %232 = vmatpush1.msra.mxu0 0.0
    %233 = vmatprep.subr.mxu0 0.0
    %234 = vmatpush1.msra.mxu0 0.0
    %235 = vmatprep.subr.mxu0 0.0
    %236 = vmatpush1.msra.mxu0 0.0
    %237 = vmatprep.subr.mxu0 0.0
    %238 = vmatpush1.msra.mxu0 0.0
    %239 = vmatprep.subr.mxu0 0.0
    %240 = vmatpush1.msra.mxu0 0.0
    %241 = vmatprep.subr.mxu0 0.0
    %242 = vmatpush1.msra.mxu0 0.0
    %243 = vmatprep.subr.mxu0 0.0
    %244 = vmatpush1.msra.mxu0 0.0
    %245 = vmatprep.subr.mxu0 0.0
    %246 = vmatpush1.msra.mxu0 0.0
    %247 = vmatprep.subr.mxu0 0.0
    %248 = vmatpush1.msra.mxu0 0.0
    %249 = vmatprep.subr.mxu0 0.0
    %250 = vmatpush1.msra.mxu0 0.0
    %251 = vmatprep.subr.mxu0 0.0
    %252 = vmatpush1.msra.mxu0 0.0
    %253 = vmatprep.subr.mxu0 0.0
    %254 = vmatpush1.msra.mxu0 0.0
    %255 = vmatprep.subr.mxu0 0.0
    %256 = vmatpush1.msra.mxu0 0.0
    %257 = vmatprep.subr.mxu0 0.0
    %258 = vmatpush1.msra.mxu0 0.0
    %259 = vmatprep.subr.mxu0 0.0
    %260 = vmatpush1.msra.mxu0 0.0
    %261 = vmatprep.subr.mxu0 0.0
    %262 = vmatpush1.msra.mxu0 0.0
    %263 = vmatprep.subr.mxu0 0.0
    %264 = vmatpush1.msra.mxu0 0.0
    %265 = vmatprep.subr.mxu0 0.0
    %266 = vmatpush1.msra.mxu0 0.0
    %267 = vmatprep.subr.mxu0 0.0
    %268 = vmatpush1.msra.mxu0 0.0
    %269 = vmatprep.subr.mxu0 0.0
    %270 = vmatpush1.msra.mxu0 0.0
    %271 = vmatprep.subr.mxu0 0.0
    %272 = vmatpush1.msra.mxu0 0.0
    %273 = vmatprep.subr.mxu0 0.0
    %274 = vmatpush1.msra.mxu0 0.0
    %275 = vmatprep.subr.mxu0 0.0
    %276 = vmatpush1.msra.mxu0 0.0
    %277 = vmatprep.subr.mxu0 0.0
    %278 = vmatpush1.msra.mxu0 0.0
    %279 = vmatprep.subr.mxu0 0.0
    %280 = vmatpush1.msra.mxu0 0.0
    %281 = vmatprep.subr.mxu0 0.0
    %282 = vmatpush1.msra.mxu0 0.0
    %283 = vmatprep.subr.mxu0 0.0
    %284 = vmatpush1.msra.mxu0 0.0
    %285 = vmatprep.subr.mxu0 0.0
    %286 = vmatpush1.msra.mxu0 0.0
    %287 = vmatprep.subr.mxu0 0.0
    %288 = vmatpush1.msra.mxu0 0.0
    %289 = vmatprep.subr.mxu0 0.0
    %290 = vmatpush1.msra.mxu0 0.0
    %291 = vmatprep.mubr.f32.mxu0 0.0
    %292 = vmatmul.mubr.f32.gmra.mrb[0].mxu0 %v85
    %v293 = vpop.f32.mrb[0].mxu0
    %v294 = vadd.f32 %v78, %v293
    %v295 = vpop.f32.mrb[0].mxu0
    %296 = vmatprep.mubr.f32.mxu0 0.0
    %297 = vmatmul.mubr.f32.gmra.mrb[0].mxu0 %v87
    %v298 = vpop.f32.mrb[0].mxu0
    %v299 = vadd.f32 %v82, %v298
    %v300 = vpop.f32.mrb[0].mxu0
    %301 = vdwg.mxu0
    %v302 = vxor.u32 %v294, 2147483648
    %v303 = vxor.u32 %v299, 2147483648
    %v304 = vmul.f32 %v302, 1.442695
    %v305 = vpow.pop %v304
    %v306 = vmul.f32 %v303, 1.442695
    %v307 = vpow.pop %v306
    %v308 = vadd.f32 %v305, 1.0
    %v309 = vadd.f32 %v307, 1.0
    %v310 = vrcp.pop %v308
    %v311 = vmul.f32 1.0, %v310
    %v312 = vrcp.pop %v309
    %v313 = vmul.f32 1.0, %v312
    %v314 = vmul.f32 %v311, %v178
    %v315 = vmul.f32 %v313, %v182
    %v316 = vsel %vm186, %v314, 0.0
    %v317 = vsel %vm186, %v315, 0.0
    %v318 = vadd.f32 %v316, %v317
    %v319 = vrot.slane %v318, 4
    %v320 = vadd.f32 %v318, %v319
    %v321 = vrot.slane %v320, 2
    %v322 = vadd.f32 %v320, %v321
    %v323 = vrot.slane %v322, 1
    %v324 = vadd.f32 %v322, %v323
    %v325 = vadd.f32 %v324, %v199
    %326 = vst.msk [vmem:[#allocation6] sm:$0x1] %vm202, %v325
    // Predicated region
    $region18: #{_disc_forward.1} parent=1 // pred_check
      _
    $region19: #{_disc_forward.1} parent=1 // pred_check_branch
      %328 = sbr.rel (0) target = $region21
    $region20: #{_disc_forward.1} parent=1 // pred_region
      %s330 = ssub.s32 16, 16
      %331 = vsyncadd [#allocation4], %s330
      %s333 = sshll.u32 [#allocation5], 4
      %s334 = int_to_ptr.vmem [resolvable:$true] %s333
      %336 = dma.vmem_to_hbm [thread:$0]  %s334, 16, %s3, [#allocation4]
    $region21: #{_disc_forward.1} parent=1 // pred_fallthru
      _
    // Predicated region
    $region22: #{_disc_forward.1} parent=1 // pred_check
      _
    $region23: #{_disc_forward.1} parent=1 // pred_check_branch
      %338 = sbr.rel (0) target = $region25
    $region24: #{_disc_forward.1} parent=1 // pred_region
      %s340 = ssub.s32 16, 16
      %341 = vsyncadd [#allocation7], %s340
      %s343 = sshll.u32 [#allocation6], 4
      %s344 = int_to_ptr.vmem [resolvable:$true] %s343
      %346 = dma.vmem_to_hbm [thread:$0]  %s344, 16, %s4, [#allocation7]
    $region25: #{_disc_forward.1} parent=1 // pred_fallthru
      _
    // Predicated region
    $region26: #{_disc_forward.1} parent=1 // pred_check
      _
    $region27: #{_disc_forward.1} parent=1 // pred_check_branch
      %348 = sbr.rel (0) target = $region29
    $region28: #{_disc_forward.1} parent=1 // pred_region
      %349 = dma.done [#allocation4], 16
    $region29: #{_disc_forward.1} parent=1 // pred_fallthru
      _
    // Predicated region
    $region30: #{_disc_forward.1} parent=1 // pred_check
      _
    $region31: #{_disc_forward.1} parent=1 // pred_check_branch
      %351 = sbr.rel (0) target = $region33
    $region32: #{_disc_forward.1} parent=1 // pred_region
      %352 = dma.done [#allocation7], 16
    $region33: #{_disc_forward.1} parent=1 // pred_fallthru
      _
    %353 = vsyncpa [#allocation3], 1
    %354 = vsyncpa [#allocation4], 1
    %355 = vsyncpa [#allocation7], 1

</llo_original>
